<compile_context>
chip_gen: v7x
topology: tpu7x:2x2x1
jax: 0.10.0
libtpu: 0.0.40
codegen_flags: <defaults>
</compile_context>

<pallas_src>
import functools
import math

import jax
import jax.numpy as jnp
from jax import lax
from jax.experimental import pallas as pl
from jax.experimental.pallas import tpu as pltpu


# ---------------------------------------------------------------------------
# Hardware-aware sizing helpers
# ---------------------------------------------------------------------------

def _tpu_vmem_capacity_bytes():
    """Per-core VMEM capacity; falls back to the v5e/v6e value (128 MiB)."""
    try:
        return int(pltpu.get_tpu_info().vmem_capacity_bytes)
    except Exception:
        return 128 * 1024 * 1024


def _pick_query_tile(seq_len, max_tile=256):
    """Largest query tile <= max_tile that divides S and is sublane aligned."""
    if seq_len <= max_tile:
        return seq_len
    start = max_tile - (max_tile % 8)
    for t in range(start, 7, -8):
        if seq_len % t == 0:
            return t
    return seq_len        # no aligned divisor: fall back to a single full-S tile


def _pick_group_size(num_heads, head_dim, batch, n_q_tiles, max_group_width):
    """Heads per grid step G.

    Only widths giving an unmasked writeback (gw % 128 == 0 or gw == hidden)
    are considered; prefer >= 4 total grid steps (megacore / DMA overlap),
    then widths within the per-chip cap, then lane-dense, then wide."""
    H = num_heads * head_dim
    best, best_score = num_heads, None
    for g in range(1, num_heads + 1):
        if num_heads % g:
            continue
        gw = g * head_dim
        if gw % 128 != 0 and gw != H:
            continue
        steps = batch * (num_heads // g) * n_q_tiles
        score = (steps >= 4, gw <= max_group_width, gw % 128 == 0, gw)
        if best_score is None or score > best_score:
            best, best_score = g, score
    return best


# ---------------------------------------------------------------------------
# Kernel
# ---------------------------------------------------------------------------

def _attn_kernel(x_ref, w_ref, b_ref, cos_ref, sinl_ref, sinr_ref, o_ref,
                 k_scr, v_scr, *, group_heads, head_dim, q_tile, mxu_dtype):
    """One (batch, head-group, query-tile) step.

    The query-tile axis is the innermost ("arbitrary") grid axis: at q == 0
    the rotated K and V for the whole sequence are computed once into VMEM
    scratch and reused by every query tile of this (batch, head-group)."""
    G, hd = group_heads, head_dim
    gw = G * hd
    half = hd // 2
    qi = pl.program_id(2)

    def tile_heads(t):                       # (rows, hd) f32 -> (rows, gw) f32
        return t if G == 1 else jnp.concatenate([t] * G, axis=-1)

    def rope(t, cos, sin_l, sin_r):
        # x*cos + rotate_half(x)*sin per hd-wide head block.  The rolls are
        # gw-wide (XLU slot); lanes that would wrap across a head boundary
        # are zeroed by the sign/zero-folded sin tables.
        return (t * cos
                + pltpu.roll(t, shift=half, axis=1) * sin_l
                + pltpu.roll(t, shift=gw - half, axis=1) * sin_r)

    # ---- K / V over the full sequence, once per (batch, head-group). ----
    @pl.when(qi == 0)
    def _():
        x_full = x_ref[0].astype(mxu_dtype)                        # (S, H)
        w_kv = w_ref[0, :, gw:]                                    # (H, 2*gw)
        kv = jnp.dot(x_full, w_kv, preferred_element_type=jnp.float32)
        kv = kv + b_ref[0, :, gw:]                                 # (S, 2*gw) f32
        cos = tile_heads(cos_ref[...])
        sin_l = tile_heads(sinl_ref[...])
        sin_r = tile_heads(sinr_ref[...])
        k_scr[...] = rope(kv[:, :gw], cos, sin_l, sin_r).astype(k_scr.dtype)
        v_scr[...] = kv[:, gw:].astype(v_scr.dtype)

    # ---- Q projection + rotary for this query tile. ----
    qoff = pl.multiple_of(qi * q_tile, q_tile)
    x_q = x_ref[0, pl.ds(qoff, q_tile), :].astype(mxu_dtype)       # (Tq, H)
    w_q = w_ref[0, :, :gw]                                         # (H, gw), pre-scaled
    q = jnp.dot(x_q, w_q, preferred_element_type=jnp.float32)
    q = q + b_ref[0, :, :gw]                                       # (Tq, gw) f32
    cos_q = tile_heads(cos_ref[pl.ds(qoff, q_tile), :])
    sinl_q = tile_heads(sinl_ref[pl.ds(qoff, q_tile), :])
    sinr_q = tile_heads(sinr_ref[pl.ds(qoff, q_tile), :])
    q = rope(q, cos_q, sinl_q, sinr_q).astype(mxu_dtype)

    # ---- Per-head attention; context stored directly into the lane-dense
    #      output block (no concatenate, no extra HBM pass). ----
    for h in range(G):                       # G is small and static
        qh = q[:, h * hd:(h + 1) * hd]                             # (Tq, hd)
        kh = k_scr[:, h * hd:(h + 1) * hd]                         # (S, hd)
        vh = v_scr[:, h * hd:(h + 1) * hd]                         # (S, hd)
        # scores = Q K^T, contracting last axes (no explicit transpose).
        s = lax.dot_general(qh, kh,
                            dimension_numbers=(((1,), (1,)), ((), ())),
                            preferred_element_type=jnp.float32)    # (Tq, S)
        m = jnp.max(s, axis=-1, keepdims=True)
        e = jnp.exp(s - m)
        # TODO(synk): on v6e/v7x a bf16 exp (cast s-m before jnp.exp) roughly
        # doubles EUP throughput once the matmuls are bf16; kept f32 here.
        l = jnp.sum(e, axis=-1, keepdims=True)
        p = e * pl.reciprocal(l, approx=False)        # exact -> tight numerics
        ctx = jnp.dot(p.astype(mxu_dtype), vh,
                      preferred_element_type=jnp.float32)          # (Tq, hd)
        o_ref[0, :, h * hd:(h + 1) * hd] = ctx.astype(o_ref.dtype)


# ---------------------------------------------------------------------------
# Wrapper
# ---------------------------------------------------------------------------

def esm_self_attention(hidden_states, wq, bq, wk, bk, wv, bv,
                       num_heads, head_dim, *,
                       mxu_dtype=jnp.bfloat16, q_tile=None, group_size=None):
    """hidden_states: [B, S, H]; wq/wk/wv: [H, H] (y = x @ W + b); biases: [H].

    mxu_dtype is the operand dtype for all MXU matmuls (accumulation is
    always f32).  bfloat16 (default) is the native MXU path on v5e/v6e/v7x;
    float32 gives bit-tight numerics at a large matmul-throughput cost."""
    B, S, H = hidden_states.shape
    assert H == num_heads * head_dim
    assert head_dim % 2 == 0, "rotary embedding requires an even head_dim"

    # Per-generation sizing: ~40 MiB VMEM budget on v7x (64 MiB/TC), ~80 MiB
    # on v5e/v6e (128 MiB), and a narrower head-group cap on v7x.
    vmem_cap = _tpu_vmem_capacity_bytes()
    vmem_limit = int(min(vmem_cap * 5 // 8, 100 * 1024 * 1024))
    max_gw = 256 if vmem_cap <= 64 * 1024 * 1024 else 512

    if q_tile is None:
        q_tile = _pick_query_tile(S)
    assert S % q_tile == 0 and (q_tile == S or q_tile % 8 == 0)
    nq = S // q_tile

    G = group_size or _pick_group_size(num_heads, head_dim, B, nq, max_gw)
    assert num_heads % G == 0
    ng = num_heads // G
    gw = G * head_dim
    assert gw % 128 == 0 or gw == H, (
        "head-group width must be a multiple of 128 lanes (or the full "
        "hidden size) for an unmasked output writeback")

    # Fold the 1/sqrt(head_dim) query scale into the query weights/bias
    # (rotary is linear, so scaling before/after rotary is identical).
    scale = head_dim ** -0.5
    wq_s = wq * scale
    bq_s = bq * scale

    def group_w(w):   # (H, H) -> (ng, H, gw); columns stay head-contiguous
        return jnp.transpose(w.reshape(H, ng, gw), (1, 0, 2))

    def group_b(b):   # (H,) -> (ng, 1, gw)
        return b.reshape(ng, 1, gw)

    # Fused [Wq | Wk | Wv] per head group.  Weights feed the MXU, so keep
    # them in the (narrow) MXU dtype -> half the DMA/VMEM at large H; biases
    # stay f32 (added after the f32 accumulation).
    w_fused = jnp.concatenate([group_w(wq_s), group_w(wk), group_w(wv)],
                              axis=-1).astype(mxu_dtype)           # (ng, H, 3*gw)
    b_fused = jnp.concatenate([group_b(bq_s), group_b(bk), group_b(bv)],
                              axis=-1).astype(jnp.float32)         # (ng, 1, 3*gw)

    # Per-head rotary tables (RotaryEmbedding._update_cos_sin_tables), kept
    # (S, head_dim) in HBM (not replicated across the G heads of a group)
    # and sign/zero-folded for the two-roll rotate_half inside the kernel.
    half = head_dim // 2
    inv_freq = 1.0 / (10000.0 ** (jnp.arange(0, head_dim, 2, dtype=jnp.float32)
                                  / head_dim))
    t = jnp.arange(S, dtype=jnp.float32)
    freqs = jnp.outer(t, inv_freq)                                 # (S, half)
    cos_h, sin_h = jnp.cos(freqs), jnp.sin(freqs)
    zeros = jnp.zeros_like(sin_h)
    cos_t = jnp.concatenate([cos_h, cos_h], -1)                    # (S, hd)
    sin_l = jnp.concatenate([zeros, sin_h], -1)                    # * roll(+half)
    sin_r = jnp.concatenate([-sin_h, zeros], -1)                   # * roll(-half)
    # TODO(synk): mark the three table specs pipeline_mode=pl.Buffered(1)
    # (constant index_map) once single-buffering is verified on the target
    # jax version; they are already only (S, head_dim) each.

    kernel = functools.partial(_attn_kernel, group_heads=G, head_dim=head_dim,
                               q_tile=q_tile, mxu_dtype=mxu_dtype)
    table_spec = pl.BlockSpec((S, head_dim), lambda b, g, q: (0, 0))

    out = pl.pallas_call(
        kernel,
        out_shape=jax.ShapeDtypeStruct((B, S, H), hidden_states.dtype),
        grid_spec=pltpu.PrefetchScalarGridSpec(
            num_scalar_prefetch=0,
            grid=(B, ng, nq),      # query tiles innermost: reuse K/V scratch
            in_specs=[
                pl.BlockSpec((1, S, H), lambda b, g, q: (b, 0, 0)),        # x
                pl.BlockSpec((1, H, 3 * gw), lambda b, g, q: (g, 0, 0)),   # Wqkv
                pl.BlockSpec((1, 1, 3 * gw), lambda b, g, q: (g, 0, 0)),   # bqkv
                table_spec,                                                # cos
                table_spec,                                                # +sin (2nd half)
                table_spec,                                                # -sin (1st half)
            ],
            # Write directly into the final [B, S, all_head_size] layout.
            out_specs=pl.BlockSpec((1, q_tile, gw), lambda b, g, q: (b, q, g)),
            scratch_shapes=[
                pltpu.VMEM((S, gw), mxu_dtype),   # rotated K, resident per (b,g)
                pltpu.VMEM((S, gw), mxu_dtype),   # V
            ]),
        compiler_params=pltpu.CompilerParams(
            dimension_semantics=("parallel", "parallel", "arbitrary"),
            vmem_limit_bytes=vmem_limit),
    )(hidden_states, w_fused, b_fused, cos_t, sin_l, sin_r)

    return out   # already (B, S, all_head_size)


# ---------------------------------------------------------------------------
# Pure-JAX reference (mirrors the PyTorch module) and test harness
# ---------------------------------------------------------------------------

def _reference(hidden_states, wq, bq, wk, bk, wv, bv, num_heads, head_dim):
    B, S, H = hidden_states.shape
    hp = jax.lax.Precision.HIGHEST

    def proj(w, b):
        y = jnp.einsum('bsh,hd->bsd', hidden_states, w, precision=hp) + b
        return y.reshape(B, S, num_heads, head_dim).transpose(0, 2, 1, 3)

    q, k, v = proj(wq, bq), proj(wk, bk), proj(wv, bv)
    q = q * (head_dim ** -0.5)

    inv_freq = 1.0 / (10000.0 ** (jnp.arange(0, head_dim, 2, dtype=jnp.float32)
                                  / head_dim))
    t = jnp.arange(S, dtype=jnp.float32)
    freqs = jnp.outer(t, inv_freq)
    emb = jnp.concatenate([freqs, freqs], axis=-1)
    cos, sin = jnp.cos(emb), jnp.sin(emb)

    def rot(x):
        return jnp.concatenate([-x[..., head_dim // 2:],
                                x[..., :head_dim // 2]], axis=-1)

    q = q * cos + rot(q) * sin
    k = k * cos + rot(k) * sin

    scores = jnp.einsum('bhqd,bhkd->bhqk', q, k, precision=hp)
    probs = jax.nn.softmax(scores, axis=-1)
    ctx = jnp.einsum('bhqk,bhkd->bhqd', probs, v, precision=hp)
    return ctx.transpose(0, 2, 1, 3).reshape(B, S, num_heads * head_dim)


def _check_case(key, batch, seq, hidden, num_heads, q_tile=None):
    head_dim = hidden // num_heads
    k_x, k_wq, k_wk, k_wv, k_bq, k_bk, k_bv = jax.random.split(key, 7)

    x = jax.random.normal(k_x, (batch, seq, hidden), jnp.float32)
    w_scale = 1.0 / math.sqrt(hidden)
    wq = jax.random.normal(k_wq, (hidden, hidden), jnp.float32) * w_scale
    wk = jax.random.normal(k_wk, (hidden, hidden), jnp.float32) * w_scale
    wv = jax.random.normal(k_wv, (hidden, hidden), jnp.float32) * w_scale
    bq = jax.random.normal(k_bq, (hidden,), jnp.float32) * 0.02
    bk = jax.random.normal(k_bk, (hidden,), jnp.float32) * 0.02
    bv = jax.random.normal(k_bv, (hidden,), jnp.float32) * 0.02

    ref = _reference(x, wq, bq, wk, bk, wv, bv, num_heads, head_dim)

    # Exact-numerics path: f32 MXU operands + exact reciprocal -> tight check.
    out_f32 = jax.block_until_ready(
        esm_self_attention(x, wq, bq, wk, bk, wv, bv, num_heads, head_dim,
                           mxu_dtype=jnp.float32, q_tile=q_tile))
    assert out_f32.shape == ref.shape
    err32 = float(jnp.max(jnp.abs(out_f32 - ref)))
    assert jnp.allclose(out_f32, ref, atol=2e-3, rtol=2e-3), \
        f"f32 path max abs err = {err32}"

    # Default fast path: bf16 MXU operands (f32 accumulation / softmax stats).
    # Tolerance sized for bf16 operand rounding over H / head_dim contractions.
    out_bf16 = jax.block_until_ready(
        esm_self_attention(x, wq, bq, wk, bk, wv, bv, num_heads, head_dim,
                           q_tile=q_tile))
    errbf = float(jnp.max(jnp.abs(out_bf16 - ref)))
    assert jnp.allclose(out_bf16, ref, atol=6e-2, rtol=6e-2), \
        f"bf16 path max abs err = {errbf}"


if __name__ == "__main__":
    root = jax.random.PRNGKey(0)
    key1, key2 = jax.random.split(root)

    # Small ESM-like config: 2 heads of 64 -> one head-group of width 128.
    _check_case(key1, batch=2, seq=8, hidden=128, num_heads=2)

    # Exercises query tiling (nq=2) + K/V scratch reuse with G>1 and ng>1.
    _check_case(key2, batch=1, seq=64, hidden=256, num_heads=4, q_tile=32)

    print("KERNEL_OK")
</pallas_src>

<mosaic_0001>
module attributes {stable_mosaic.version = 11 : i64} {
  func.func @_attn_kernel(%arg0: i32, %arg1: i32, %arg2: i32, %arg3: memref<1x8x128xf32, #tpu.memory_space<vmem>>, %arg4: memref<1x128x384xf32, #tpu.memory_space<vmem>>, %arg5: memref<1x1x384xf32, #tpu.memory_space<vmem>>, %arg6: memref<8x64xf32, #tpu.memory_space<vmem>>, %arg7: memref<8x64xf32, #tpu.memory_space<vmem>>, %arg8: memref<8x64xf32, #tpu.memory_space<vmem>>, %arg9: memref<1x8x128xf32, #tpu.memory_space<vmem>>, %arg10: memref<8x128xf32, #tpu.memory_space<vmem>>, %arg11: memref<8x128xf32, #tpu.memory_space<vmem>>) attributes {dimension_semantics = [#tpu.dimension_semantics<parallel>, #tpu.dimension_semantics<parallel>, #tpu.dimension_semantics<arbitrary>], iteration_bounds = array<i64: 2, 1, 1>, scalar_prefetch = 0 : i64, scratch_operands = 2 : i64, tpu.core_type = #tpu.core_type<tc>, window_params = [{transform_indices = @transform_0, window_bounds = array<i64: 1, 8, 128>}, {transform_indices = @transform_1, window_bounds = array<i64: 1, 128, 384>}, {transform_indices = @transform_2, window_bounds = array<i64: 1, 1, 384>}, {pipeline_mode = #tpu.pipeline_mode<synchronous>, transform_indices = @transform_3, window_bounds = array<i64: 8, 64>}, {pipeline_mode = #tpu.pipeline_mode<synchronous>, transform_indices = @transform_4, window_bounds = array<i64: 8, 64>}, {pipeline_mode = #tpu.pipeline_mode<synchronous>, transform_indices = @transform_5, window_bounds = array<i64: 8, 64>}, {transform_indices = @transform_6, window_bounds = array<i64: 1, 8, 128>}]} {
    %c0_i32 = arith.constant 0 : i32
    %0 = arith.cmpi eq, %arg2, %c0_i32 : i32
    %1 = arith.extui %0 : i1 to i32
    %c0_i32_0 = arith.constant 0 : i32
    %2 = arith.cmpi ne, %1, %c0_i32_0 : i32
    scf.if %2 {
      %c0_32 = arith.constant 0 : index
      %c0_33 = arith.constant 0 : index
      %c0_34 = arith.constant 0 : index
      %67 = vector.load %arg3[%c0_32, %c0_33, %c0_34] : memref<1x8x128xf32, #tpu.memory_space<vmem>>, vector<1x8x128xf32>
      %68 = vector.shape_cast %67 : vector<1x8x128xf32> to vector<8x128xf32>
      %c0_35 = arith.constant 0 : index
      %c0_36 = arith.constant 0 : index
      %c128 = arith.constant 128 : index
      %69 = vector.load %arg4[%c0_35, %c0_36, %c128] : memref<1x128x384xf32, #tpu.memory_space<vmem>>, vector<1x128x256xf32>
      %70 = vector.shape_cast %69 : vector<1x128x256xf32> to vector<128x256xf32>
      %cst_37 = arith.constant dense<0.000000e+00> : vector<8x256xf32>
      %71 = tpu.matmul %68, %70, %cst_37 {dimension_numbers = #tpu.dot_dimension_numbers<[1], [0], [0], [1], [0, 0, 1, 1], [], []>} : vector<8x128xf32>, vector<128x256xf32>, vector<8x256xf32> -> vector<8x256xf32>
      %c0_38 = arith.constant 0 : index
      %c0_39 = arith.constant 0 : index
      %c128_40 = arith.constant 128 : index
      %72 = vector.load %arg5[%c0_38, %c0_39, %c128_40] : memref<1x1x384xf32, #tpu.memory_space<vmem>>, vector<1x1x256xf32>
      %73 = vector.shape_cast %72 : vector<1x1x256xf32> to vector<1x256xf32>
      %74 = vector.broadcast %73 : vector<1x256xf32> to vector<8x256xf32>
      %75 = arith.addf %71, %74 : vector<8x256xf32>
      %c0_41 = arith.constant 0 : index
      %c0_42 = arith.constant 0 : index
      %76 = vector.load %arg6[%c0_41, %c0_42] : memref<8x64xf32, #tpu.memory_space<vmem>>, vector<8x64xf32>
      %77 = tpu.concatenate %76, %76 in 1 : vector<8x64xf32>, vector<8x64xf32> -> vector<8x128xf32>
      %c0_43 = arith.constant 0 : index
      %c0_44 = arith.constant 0 : index
      %78 = vector.load %arg7[%c0_43, %c0_44] : memref<8x64xf32, #tpu.memory_space<vmem>>, vector<8x64xf32>
      %79 = tpu.concatenate %78, %78 in 1 : vector<8x64xf32>, vector<8x64xf32> -> vector<8x128xf32>
      %c0_45 = arith.constant 0 : index
      %c0_46 = arith.constant 0 : index
      %80 = vector.load %arg8[%c0_45, %c0_46] : memref<8x64xf32, #tpu.memory_space<vmem>>, vector<8x64xf32>
      %81 = tpu.concatenate %80, %80 in 1 : vector<8x64xf32>, vector<8x64xf32> -> vector<8x128xf32>
      %82 = vector.extract_strided_slice %75 {offsets = [0, 0], sizes = [8, 128], strides = [1, 1]} : vector<8x256xf32> to vector<8x128xf32>
      %83 = arith.mulf %82, %77 : vector<8x128xf32>
      %c32_i32_47 = arith.constant 32 : i32
      %84 = tpu.dynamic_rotate %82 by %c32_i32_47 dim 1 : vector<8x128xf32>, i32 -> vector<8x128xf32>
      %85 = arith.mulf %84, %79 : vector<8x128xf32>
      %86 = arith.addf %83, %85 : vector<8x128xf32>
      %c96_i32_48 = arith.constant 96 : i32
      %87 = tpu.dynamic_rotate %82 by %c96_i32_48 dim 1 : vector<8x128xf32>, i32 -> vector<8x128xf32>
      %88 = arith.mulf %87, %81 : vector<8x128xf32>
      %89 = arith.addf %86, %88 : vector<8x128xf32>
      %c0_49 = arith.constant 0 : index
      %c0_50 = arith.constant 0 : index
      %90 = vector.load %arg10[%c0_49, %c0_50] : memref<8x128xf32, #tpu.memory_space<vmem>>, vector<8x128xf32>
      tpu.vector_store %arg10[%c0_49, %c0_50], %89 {strides = array<i32>} : memref<8x128xf32, #tpu.memory_space<vmem>>, vector<8x128xf32>,
      %91 = vector.extract_strided_slice %75 {offsets = [0, 128], sizes = [8, 128], strides = [1, 1]} : vector<8x256xf32> to vector<8x128xf32>
      %c0_51 = arith.constant 0 : index
      %c0_52 = arith.constant 0 : index
      %92 = vector.load %arg11[%c0_51, %c0_52] : memref<8x128xf32, #tpu.memory_space<vmem>>, vector<8x128xf32>
      tpu.vector_store %arg11[%c0_51, %c0_52], %91 {strides = array<i32>} : memref<8x128xf32, #tpu.memory_space<vmem>>, vector<8x128xf32>,
    } else {
    }
    %c8_i32 = arith.constant 8 : i32
    %3 = arith.muli %arg2, %c8_i32 : i32
    %4 = tpu.assume_multiple %3, 8 : i32
    %c0 = arith.constant 0 : index
    %5 = arith.index_cast %4 : i32 to index
    %c0_1 = arith.constant 0 : index
    %6 = vector.load %arg3[%c0, %5, %c0_1] : memref<1x8x128xf32, #tpu.memory_space<vmem>>, vector<1x8x128xf32>
    %7 = vector.shape_cast %6 : vector<1x8x128xf32> to vector<8x128xf32>
    %c0_2 = arith.constant 0 : index
    %c0_3 = arith.constant 0 : index
    %c0_4 = arith.constant 0 : index
    %8 = vector.load %arg4[%c0_2, %c0_3, %c0_4] : memref<1x128x384xf32, #tpu.memory_space<vmem>>, vector<1x128x128xf32>
    %9 = vector.shape_cast %8 : vector<1x128x128xf32> to vector<128x128xf32>
    %cst = arith.constant dense<0.000000e+00> : vector<8x128xf32>
    %10 = tpu.matmul %7, %9, %cst {dimension_numbers = #tpu.dot_dimension_numbers<[1], [0], [0], [1], [0, 0, 1, 1], [], []>} : vector<8x128xf32>, vector<128x128xf32>, vector<8x128xf32> -> vector<8x128xf32>
    %c0_5 = arith.constant 0 : index
    %c0_6 = arith.constant 0 : index
    %c0_7 = arith.constant 0 : index
    %11 = vector.load %arg5[%c0_5, %c0_6, %c0_7] : memref<1x1x384xf32, #tpu.memory_space<vmem>>, vector<1x1x128xf32>
    %12 = vector.shape_cast %11 : vector<1x1x128xf32> to vector<1x128xf32>
    %13 = vector.broadcast %12 : vector<1x128xf32> to vector<8x128xf32>
    %14 = arith.addf %10, %13 : vector<8x128xf32>
    %15 = arith.index_cast %4 : i32 to index
    %c0_8 = arith.constant 0 : index
    %16 = vector.load %arg6[%15, %c0_8] : memref<8x64xf32, #tpu.memory_space<vmem>>, vector<8x64xf32>
    %17 = tpu.concatenate %16, %16 in 1 : vector<8x64xf32>, vector<8x64xf32> -> vector<8x128xf32>
    %18 = arith.index_cast %4 : i32 to index
    %c0_9 = arith.constant 0 : index
    %19 = vector.load %arg7[%18, %c0_9] : memref<8x64xf32, #tpu.memory_space<vmem>>, vector<8x64xf32>
    %20 = tpu.concatenate %19, %19 in 1 : vector<8x64xf32>, vector<8x64xf32> -> vector<8x128xf32>
    %21 = arith.index_cast %4 : i32 to index
    %c0_10 = arith.constant 0 : index
    %22 = vector.load %arg8[%21, %c0_10] : memref<8x64xf32, #tpu.memory_space<vmem>>, vector<8x64xf32>
    %23 = tpu.concatenate %22, %22 in 1 : vector<8x64xf32>, vector<8x64xf32> -> vector<8x128xf32>
    %24 = arith.mulf %14, %17 : vector<8x128xf32>
    %c32_i32 = arith.constant 32 : i32
    %25 = tpu.dynamic_rotate %14 by %c32_i32 dim 1 : vector<8x128xf32>, i32 -> vector<8x128xf32>
    %26 = arith.mulf %25, %20 : vector<8x128xf32>
    %27 = arith.addf %24, %26 : vector<8x128xf32>
    %c96_i32 = arith.constant 96 : i32
    %28 = tpu.dynamic_rotate %14 by %c96_i32 dim 1 : vector<8x128xf32>, i32 -> vector<8x128xf32>
    %29 = arith.mulf %28, %23 : vector<8x128xf32>
    %30 = arith.addf %27, %29 : vector<8x128xf32>
    %31 = vector.extract_strided_slice %30 {offsets = [0, 0], sizes = [8, 64], strides = [1, 1]} : vector<8x128xf32> to vector<8x64xf32>
    %c0_11 = arith.constant 0 : index
    %c0_12 = arith.constant 0 : index
    %32 = vector.load %arg10[%c0_11, %c0_12] : memref<8x128xf32, #tpu.memory_space<vmem>>, vector<8x64xf32>
    %c0_13 = arith.constant 0 : index
    %c0_14 = arith.constant 0 : index
    %33 = vector.load %arg11[%c0_13, %c0_14] : memref<8x128xf32, #tpu.memory_space<vmem>>, vector<8x64xf32>
    %cst_15 = arith.constant dense<0.000000e+00> : vector<8x8xf32>
    %34 = tpu.matmul %31, %32, %cst_15 {dimension_numbers = #tpu.dot_dimension_numbers<[1], [1], [0], [0], [0, 0, 1, 0], [], []>} : vector<8x64xf32>, vector<8x64xf32>, vector<8x8xf32> -> vector<8x8xf32>
    %cst_16 = arith.constant dense<0xFF800000> : vector<8xf32>
    %35 = vector.multi_reduction <maximumf>, %34, %cst_16 [1] : vector<8x8xf32> to vector<8xf32>
    %36 = vector.shape_cast %35 : vector<8xf32> to vector<8x1xf32>
    %37 = vector.broadcast %36 : vector<8x1xf32> to vector<8x8xf32>
    %38 = arith.subf %34, %37 : vector<8x8xf32>
    %39 = math.exp %38 : vector<8x8xf32>
    %cst_17 = arith.constant dense<0.000000e+00> : vector<8xf32>
    %40 = vector.multi_reduction <add>, %39, %cst_17 [1] : vector<8x8xf32> to vector<8xf32>
    %41 = vector.shape_cast %40 : vector<8xf32> to vector<8x1xf32>
    %42 = tpu.reciprocal %41 : vector<8x1xf32> -> vector<8x1xf32>
    %43 = vector.broadcast %42 : vector<8x1xf32> to vector<8x8xf32>
    %44 = arith.mulf %39, %43 : vector<8x8xf32>
    %cst_18 = arith.constant dense<0.000000e+00> : vector<8x64xf32>
    %45 = tpu.matmul %44, %33, %cst_18 {dimension_numbers = #tpu.dot_dimension_numbers<[1], [0], [0], [1], [0, 0, 1, 1], [], []>} : vector<8x8xf32>, vector<8x64xf32>, vector<8x64xf32> -> vector<8x64xf32>
    %c0_19 = arith.constant 0 : index
    %c0_20 = arith.constant 0 : index
    %c0_21 = arith.constant 0 : index
    %46 = vector.load %arg9[%c0_19, %c0_20, %c0_21] : memref<1x8x128xf32, #tpu.memory_space<vmem>>, vector<1x8x64xf32>
    %47 = vector.shape_cast %46 : vector<1x8x64xf32> to vector<8x64xf32>
    %48 = vector.shape_cast %45 : vector<8x64xf32> to vector<1x8x64xf32>
    tpu.vector_store %arg9[%c0_19, %c0_20, %c0_21], %48 {strides = array<i32>} : memref<1x8x128xf32, #tpu.memory_space<vmem>>, vector<1x8x64xf32>,
    %49 = vector.extract_strided_slice %30 {offsets = [0, 64], sizes = [8, 64], strides = [1, 1]} : vector<8x128xf32> to vector<8x64xf32>
    %c0_22 = arith.constant 0 : index
    %c64 = arith.constant 64 : index
    %50 = vector.load %arg10[%c0_22, %c64] : memref<8x128xf32, #tpu.memory_space<vmem>>, vector<8x64xf32>
    %c0_23 = arith.constant 0 : index
    %c64_24 = arith.constant 64 : index
    %51 = vector.load %arg11[%c0_23, %c64_24] : memref<8x128xf32, #tpu.memory_space<vmem>>, vector<8x64xf32>
    %cst_25 = arith.constant dense<0.000000e+00> : vector<8x8xf32>
    %52 = tpu.matmul %49, %50, %cst_25 {dimension_numbers = #tpu.dot_dimension_numbers<[1], [1], [0], [0], [0, 0, 1, 0], [], []>} : vector<8x64xf32>, vector<8x64xf32>, vector<8x8xf32> -> vector<8x8xf32>
    %cst_26 = arith.constant dense<0xFF800000> : vector<8xf32>
    %53 = vector.multi_reduction <maximumf>, %52, %cst_26 [1] : vector<8x8xf32> to vector<8xf32>
    %54 = vector.shape_cast %53 : vector<8xf32> to vector<8x1xf32>
    %55 = vector.broadcast %54 : vector<8x1xf32> to vector<8x8xf32>
    %56 = arith.subf %52, %55 : vector<8x8xf32>
    %57 = math.exp %56 : vector<8x8xf32>
    %cst_27 = arith.constant dense<0.000000e+00> : vector<8xf32>
    %58 = vector.multi_reduction <add>, %57, %cst_27 [1] : vector<8x8xf32> to vector<8xf32>
    %59 = vector.shape_cast %58 : vector<8xf32> to vector<8x1xf32>
    %60 = tpu.reciprocal %59 : vector<8x1xf32> -> vector<8x1xf32>
    %61 = vector.broadcast %60 : vector<8x1xf32> to vector<8x8xf32>
    %62 = arith.mulf %57, %61 : vector<8x8xf32>
    %cst_28 = arith.constant dense<0.000000e+00> : vector<8x64xf32>
    %63 = tpu.matmul %62, %51, %cst_28 {dimension_numbers = #tpu.dot_dimension_numbers<[1], [0], [0], [1], [0, 0, 1, 1], [], []>} : vector<8x8xf32>, vector<8x64xf32>, vector<8x64xf32> -> vector<8x64xf32>
    %c0_29 = arith.constant 0 : index
    %c0_30 = arith.constant 0 : index
    %c64_31 = arith.constant 64 : index
    %64 = vector.load %arg9[%c0_29, %c0_30, %c64_31] : memref<1x8x128xf32, #tpu.memory_space<vmem>>, vector<1x8x64xf32>
    %65 = vector.shape_cast %64 : vector<1x8x64xf32> to vector<8x64xf32>
    %66 = vector.shape_cast %63 : vector<8x64xf32> to vector<1x8x64xf32>
    tpu.vector_store %arg9[%c0_29, %c0_30, %c64_31], %66 {strides = array<i32>} : memref<1x8x128xf32, #tpu.memory_space<vmem>>, vector<1x8x64xf32>,
    return
  }
  func.func @transform_0(%arg0: i32, %arg1: i32, %arg2: i32) -> (i32, i32, i32) {
    %c0_i32 = arith.constant 0 : i32
    %c0_i32_0 = arith.constant 0 : i32
    %c0_i32_1 = arith.constant 0 : i32
    return %arg0, %c0_i32, %c0_i32_0 : i32, i32, i32
  }
  func.func @transform_1(%arg0: i32, %arg1: i32, %arg2: i32) -> (i32, i32, i32) {
    %c0_i32 = arith.constant 0 : i32
    %c0_i32_0 = arith.constant 0 : i32
    %c0_i32_1 = arith.constant 0 : i32
    return %arg1, %c0_i32, %c0_i32_0 : i32, i32, i32
  }
  func.func @transform_2(%arg0: i32, %arg1: i32, %arg2: i32) -> (i32, i32, i32) {
    %c0_i32 = arith.constant 0 : i32
    %c0_i32_0 = arith.constant 0 : i32
    %c0_i32_1 = arith.constant 0 : i32
    return %arg1, %c0_i32, %c0_i32_0 : i32, i32, i32
  }
  func.func @transform_3(%arg0: i32, %arg1: i32, %arg2: i32) -> (i32, i32) {
    %c0_i32 = arith.constant 0 : i32
    %c0_i32_0 = arith.constant 0 : i32
    %c0_i32_1 = arith.constant 0 : i32
    return %c0_i32, %c0_i32_0 : i32, i32
  }
  func.func @transform_4(%arg0: i32, %arg1: i32, %arg2: i32) -> (i32, i32) {
    %c0_i32 = arith.constant 0 : i32
    %c0_i32_0 = arith.constant 0 : i32
    %c0_i32_1 = arith.constant 0 : i32
    return %c0_i32, %c0_i32_0 : i32, i32
  }
  func.func @transform_5(%arg0: i32, %arg1: i32, %arg2: i32) -> (i32, i32) {
    %c0_i32 = arith.constant 0 : i32
    %c0_i32_0 = arith.constant 0 : i32
    %c0_i32_1 = arith.constant 0 : i32
    return %c0_i32, %c0_i32_0 : i32, i32
  }
  func.func @transform_6(%arg0: i32, %arg1: i32, %arg2: i32) -> (i32, i32, i32) {
    %c0_i32 = arith.constant 0 : i32
    return %arg0, %arg2, %arg1 : i32, i32, i32
  }
}

</mosaic_0001>

<llo_original>
// kernel: tpu_custom_call.1
$region0: #{tpu_custom_call.1}
  #allocation0 [shape = 'u32[]', space=smem, size = 0x4, offset = 0x4, fixed_abs, tag = 'smem constant byte address 0x4 - core index']
  #allocation1 [shape = 'u32[144,128]{1,0:T(1,128)}', space=vmem, size = 0x12000, scoped, tag = 'internal scratch']
  #allocation2 [shape = 'f32[8,128]{1,0:T(8,128)}', space=vmem, size = 0x1000, scoped, tag = 'scratch operand']
  #allocation3 [shape = 'f32[8,128]{1,0:T(8,128)}', space=vmem, size = 0x1000, scoped, tag = 'scratch operand']
  %s0 = inlined_call_operand.hbm [shape: f32[2,8,128], index: 0, kind: input, shape index: {}]
  %s1 = inlined_call_operand.hbm [shape: f32[1,128,384], index: 1, kind: input, shape index: {}]
  %s2 = inlined_call_operand.hbm [shape: f32[1,1,384], index: 2, kind: input, shape index: {}]
  %s3 = inlined_call_operand.hbm [shape: f32[8,64], index: 3, kind: input, shape index: {}]
  %s4 = inlined_call_operand.hbm [shape: f32[8,64], index: 4, kind: input, shape index: {}]
  %s5 = inlined_call_operand.hbm [shape: f32[8,64], index: 5, kind: input, shape index: {}]
  %s6 = inlined_call_operand.hbm [shape: f32[2,8,128], index: 6, kind: output, shape index: {}]
  %s7 = sld [smem:[#allocation0]]
  $region85: #{tpu_custom_call.1} parent=0
    _
  %s9 = ssub.s32 1, %s7
  %s10 = scalar_select 0, %s9, %s7
  $region1: #{tpu_custom_call.1} parent=0
    #allocation4 [shape = 'u8[8192]{0}', space=vmem, size = 0x2000, scoped, tag = 'input window, operand 0']
    #allocation5 [shape = 's32[2]{0}', space=sflag, size = 0x8, scoped, tag = 'scoped memory for tpu_custom_call.1']
    #allocation6 [shape = 's32[2]{0}', space=sflag, size = 0x8, scoped, tag = 'scoped memory for tpu_custom_call.1']
    #allocation7 [shape = 'u8[196608]{0}', space=vmem, size = 0x30000, scoped, tag = 'input window, operand 1, single buffered']
    #allocation8 [shape = 's32[1]{0}', space=sflag, size = 0x4, scoped, tag = 'scoped memory for tpu_custom_call.1']
    #allocation9 [shape = 'u8[1536]{0}', space=vmem, size = 0x800, scoped, tag = 'input window, operand 2, single buffered']
    #allocation10 [shape = 'u8[4096]{0}', space=vmem, size = 0x1000, scoped, tag = 'input window, operand 3, single buffered']
    #allocation11 [shape = 's32[1]{0}', space=sflag, size = 0x4, scoped, tag = 'scoped memory for tpu_custom_call.1']
    #allocation12 [shape = 'u8[4096]{0}', space=vmem, size = 0x1000, scoped, tag = 'input window, operand 4, single buffered']
    #allocation13 [shape = 'u8[4096]{0}', space=vmem, size = 0x1000, scoped, tag = 'input window, operand 5, single buffered']
    #allocation14 [shape = 's32[1]{0}', space=sflag, size = 0x4, scoped, tag = 'scoped memory for tpu_custom_call.1']
    #allocation15 [shape = 'u8[8192]{0}', space=vmem, size = 0x2000, scoped, tag = 'output window, operand 0']
    %11 = vsyncpa [#allocation5], 0
    %s12 = scalar_lea.sflag [#allocation5], 1
    %13 = vsyncpa %s12, 0
    %14 = vsyncpa [#allocation8], 0
    %15 = vsyncpa [#allocation11], 0
    %16 = vsyncpa [#allocation14], 0
    %17 = vsyncpa [#allocation6], 0
    %s18 = scalar_lea.sflag [#allocation6], 1
    %19 = vsyncpa %s18, 0
    loop: start=0, step=1, limit=4
    $region2: #{tpu_custom_call.1} parent=1 // loop_pre_header
      _
    $region3: #{tpu_custom_call.1} parent=1 // loop_header
      %s21 = sphi 0, %s25
      %p22 = scmp.ge.s32.totalorder %s21, 4
      %s28 = sphi 0, %s47
      %s29 = sphi 0, %s43
      %s30 = sphi 0, %s39
      %s31 = sphi 0, %s28
      %s32 = sphi 0, %s29
      %s33 = sphi 0, %s30
      %s34 = sphi 0, %s31
      %s35 = sphi 0, %s32
      %s36 = sphi 0, %s33
      %s50 = sphi 0, %s52
      %s53 = sphi 0, %s50
      %s54 = sphi 0, %s53
      %s70 = sphi 0, %s54
      %s76 = sphi 0, %s78
      %s79 = sphi 0, %s76
      %s80 = sphi 0, %s79
      %s96 = sphi 0, %s80
      %s102 = sphi 0, %s104
      %s105 = sphi 0, %s102
      %s106 = sphi 0, %s105
      %s122 = sphi 0, %s106
      %s126 = sphi 0, %s126
      %s128 = sphi 0, %s126
      %s129 = sphi 0, %s128
      %s143 = sphi 0, %s129
      %s147 = sphi 0, %s147
      %s149 = sphi 0, %s147
      %s150 = sphi 0, %s149
      %s164 = sphi 0, %s150
      %s168 = sphi 0, %s168
      %s170 = sphi 0, %s168
      %s171 = sphi 0, %s170
      %s185 = sphi 0, %s171
      %s195 = sphi 0, %s197
      %s198 = sphi 0, %s195
      %s199 = sphi 0, %s198
      %s215 = sphi 0, %s199
    $region4: #{tpu_custom_call.1} parent=1 // loop_header_branch
      %24 = sbr.rel (%p22) target = $region8
    $region5: #{tpu_custom_call.1} parent=1 // loop_body
      %s26 = ssub.s32 %s21, 1
      %s27 = ssub.s32 %s21, 2
      %s37 = sadd.s32 1, %s30
      %p38 = scmp.ge.s32.totalorder %s37, 1
      %s39 = scalar_select %p38, 0, %s37
      %s40 = sadd.s32 1, %s29
      %s41 = scalar_select %p38, %s40, %s29
      %p42 = scmp.ge.s32.totalorder %s41, 1
      %s43 = scalar_select %p42, 0, %s41
      %s44 = sadd.s32 1, %s28
      %s45 = scalar_select %p42, %s44, %s28
      %p46 = scmp.ge.s32.totalorder %s45, 2
      %s47 = scalar_select %p46, 0, %s45
      %s48 = ssub.s32 %s28, %s47
      %p49 = scmp.eq.s32.totalorder %s48, 0
      %s51 = sadd.s32 %s50, 1
      %s52 = scalar_select %p49, %s50, %s51
      %p55 = pneg %p49
      %p56 = scmp.eq.s32.totalorder %s21, 1
      %p57 = por %p55, %p56
      %p58 = scmp.ne.s32.totalorder %s50, %s53
      %p59 = scmp.eq.s32.totalorder %s21, 0
      %p60 = por %p58, %p59
      %p61 = scmp.ne.s32.totalorder %s50, %s53
      %p62 = scmp.eq.s32.totalorder %s26, 1
      %p63 = por %p61, %p62
      %p64 = scmp.ne.s32.totalorder %s53, %s54
      %p65 = scmp.eq.s32.totalorder %s26, 0
      %p66 = por %p64, %p65
      %p67 = scmp.ne.s32.totalorder %s53, %s54
      %p68 = scmp.eq.s32.totalorder %s27, 1
      %p69 = por %p67, %p68
      %p71 = scmp.ne.s32.totalorder %s54, %s70
      %p72 = scmp.eq.s32.totalorder %s27, 0
      %p73 = por %p71, %p72
      %s74 = ssub.s32 %s29, %s43
      %p75 = scmp.eq.s32.totalorder %s74, 0
      %s77 = sadd.s32 %s76, 1
      %s78 = scalar_select %p75, %s76, %s77
      %p81 = pneg %p75
      %p82 = scmp.eq.s32.totalorder %s21, 1
      %p83 = por %p81, %p82
      %p84 = scmp.ne.s32.totalorder %s76, %s79
      %p85 = scmp.eq.s32.totalorder %s21, 0
      %p86 = por %p84, %p85
      %p87 = scmp.ne.s32.totalorder %s76, %s79
      %p88 = scmp.eq.s32.totalorder %s26, 1
      %p89 = por %p87, %p88
      %p90 = scmp.ne.s32.totalorder %s79, %s80
      %p91 = scmp.eq.s32.totalorder %s26, 0
      %p92 = por %p90, %p91
      %p93 = scmp.ne.s32.totalorder %s79, %s80
      %p94 = scmp.eq.s32.totalorder %s27, 1
      %p95 = por %p93, %p94
      %p97 = scmp.ne.s32.totalorder %s80, %s96
      %p98 = scmp.eq.s32.totalorder %s27, 0
      %p99 = por %p97, %p98
      %s100 = ssub.s32 %s29, %s43
      %p101 = scmp.eq.s32.totalorder %s100, 0
      %s103 = sadd.s32 %s102, 1
      %s104 = scalar_select %p101, %s102, %s103
      %p107 = pneg %p101
      %p108 = scmp.eq.s32.totalorder %s21, 1
      %p109 = por %p107, %p108
      %p110 = scmp.ne.s32.totalorder %s102, %s105
      %p111 = scmp.eq.s32.totalorder %s21, 0
      %p112 = por %p110, %p111
      %p113 = scmp.ne.s32.totalorder %s102, %s105
      %p114 = scmp.eq.s32.totalorder %s26, 1
      %p115 = por %p113, %p114
      %p116 = scmp.ne.s32.totalorder %s105, %s106
      %p117 = scmp.eq.s32.totalorder %s26, 0
      %p118 = por %p116, %p117
      %p119 = scmp.ne.s32.totalorder %s105, %s106
      %p120 = scmp.eq.s32.totalorder %s27, 1
      %p121 = por %p119, %p120
      %p123 = scmp.ne.s32.totalorder %s106, %s122
      %p124 = scmp.eq.s32.totalorder %s27, 0
      %p125 = por %p123, %p124
      %s127 = sadd.s32 %s126, 1
      %p130 = scmp.eq.s32.totalorder %s21, 1
      %p131 = scmp.ne.s32.totalorder %s126, %s128
      %p132 = scmp.eq.s32.totalorder %s21, 0
      %p133 = por %p131, %p132
      %p134 = scmp.ne.s32.totalorder %s126, %s128
      %p135 = scmp.eq.s32.totalorder %s26, 1
      %p136 = por %p134, %p135
      %p137 = scmp.ne.s32.totalorder %s128, %s129
      %p138 = scmp.eq.s32.totalorder %s26, 0
      %p139 = por %p137, %p138
      %p140 = scmp.ne.s32.totalorder %s128, %s129
      %p141 = scmp.eq.s32.totalorder %s27, 1
      %p142 = por %p140, %p141
      %p144 = scmp.ne.s32.totalorder %s129, %s143
      %p145 = scmp.eq.s32.totalorder %s27, 0
      %p146 = por %p144, %p145
      %s148 = sadd.s32 %s147, 1
      %p151 = scmp.eq.s32.totalorder %s21, 1
      %p152 = scmp.ne.s32.totalorder %s147, %s149
      %p153 = scmp.eq.s32.totalorder %s21, 0
      %p154 = por %p152, %p153
      %p155 = scmp.ne.s32.totalorder %s147, %s149
      %p156 = scmp.eq.s32.totalorder %s26, 1
      %p157 = por %p155, %p156
      %p158 = scmp.ne.s32.totalorder %s149, %s150
      %p159 = scmp.eq.s32.totalorder %s26, 0
      %p160 = por %p158, %p159
      %p161 = scmp.ne.s32.totalorder %s149, %s150
      %p162 = scmp.eq.s32.totalorder %s27, 1
      %p163 = por %p161, %p162
      %p165 = scmp.ne.s32.totalorder %s150, %s164
      %p166 = scmp.eq.s32.totalorder %s27, 0
      %p167 = por %p165, %p166
      %s169 = sadd.s32 %s168, 1
      %p172 = scmp.eq.s32.totalorder %s21, 1
      %p173 = scmp.ne.s32.totalorder %s168, %s170
      %p174 = scmp.eq.s32.totalorder %s21, 0
      %p175 = por %p173, %p174
      %p176 = scmp.ne.s32.totalorder %s168, %s170
      %p177 = scmp.eq.s32.totalorder %s26, 1
      %p178 = por %p176, %p177
      %p179 = scmp.ne.s32.totalorder %s170, %s171
      %p180 = scmp.eq.s32.totalorder %s26, 0
      %p181 = por %p179, %p180
      %p182 = scmp.ne.s32.totalorder %s170, %s171
      %p183 = scmp.eq.s32.totalorder %s27, 1
      %p184 = por %p182, %p183
      %p186 = scmp.ne.s32.totalorder %s171, %s185
      %p187 = scmp.eq.s32.totalorder %s27, 0
      %p188 = por %p186, %p187
      %s189 = ssub.s32 %s28, %s47
      %s190 = ssub.s32 %s30, %s39
      %s191 = sor.u32 %s189, %s190
      %s192 = ssub.s32 %s29, %s43
      %s193 = sor.u32 %s191, %s192
      %p194 = scmp.eq.s32.totalorder %s193, 0
      %s196 = sadd.s32 %s195, 1
      %s197 = scalar_select %p194, %s195, %s196
      %p200 = pneg %p194
      %p201 = scmp.eq.s32.totalorder %s21, 1
      %p202 = por %p200, %p201
      %p203 = scmp.ne.s32.totalorder %s195, %s198
      %p204 = scmp.eq.s32.totalorder %s21, 0
      %p205 = por %p203, %p204
      %p206 = scmp.ne.s32.totalorder %s195, %s198
      %p207 = scmp.eq.s32.totalorder %s26, 1
      %p208 = por %p206, %p207
      %p209 = scmp.ne.s32.totalorder %s198, %s199
      %p210 = scmp.eq.s32.totalorder %s26, 0
      %p211 = por %p209, %p210
      %p212 = scmp.ne.s32.totalorder %s198, %s199
      %p213 = scmp.eq.s32.totalorder %s27, 1
      %p214 = por %p212, %p213
      %p216 = scmp.ne.s32.totalorder %s199, %s215
      %p217 = scmp.eq.s32.totalorder %s27, 0
      %p218 = por %p216, %p217
      %p219 = scmp.le.s32.totalorder 1, %s21
      %p220 = scmp.lt.s32.totalorder %s21, 3
      %p221 = pnand %p219, %p220
      %p222 = pneg %p221
      // Predicated region
      $region9: #{tpu_custom_call.1} parent=5 // pred_check
        _
      $region10: #{tpu_custom_call.1} parent=5 // pred_check_branch
        %224 = sbr.rel (%p221) target = $region12
      $region11: #{tpu_custom_call.1} parent=5 // pred_region
        %s225 = ssub.s32 %s21, 1
        // Predicated region
        $region13: #{tpu_custom_call.1} parent=11 // pred_check
          %p226 = pneg %p92
        $region14: #{tpu_custom_call.1} parent=11 // pred_check_branch
          %228 = sbr.rel (%p226) target = $region16
        $region15: #{tpu_custom_call.1} parent=11 // pred_region
          %s230 = ssub.s32 6144, 6144
          %231 = vsyncadd [#allocation8], %s230
          %s232 = smul.addr %s32, 48
          %s233 = smul.addr %s232, 128
          %s234 = scalar_lea.hbm %s1, %s233
          %s235 = sshll.u32 [#allocation7], 4
          %s236 = int_to_ptr.vmem [resolvable:$true] %s235
          %241 = dma.hbm_to_vmem [thread:$0]  %s234, 6144, %s236, [#allocation8], 384, 384, 24
        $region16: #{tpu_custom_call.1} parent=11 // pred_fallthru
          _
        // Predicated region
        $region17: #{tpu_custom_call.1} parent=11 // pred_check
          %p242 = pneg %p118
        $region18: #{tpu_custom_call.1} parent=11 // pred_check_branch
          %244 = sbr.rel (%p242) target = $region20
        $region19: #{tpu_custom_call.1} parent=11 // pred_region
          %s246 = ssub.s32 48, 48
          %247 = vsyncadd [#allocation8], %s246
          %s248 = smul.addr %s32, 3
          %s249 = smul.addr %s248, 16
          %s250 = scalar_lea.hbm %s2, %s249
          %s252 = sshll.u32 [#allocation9], 4
          %s253 = int_to_ptr.vmem [resolvable:$true] %s252
          %255 = dma.hbm_to_vmem [thread:$0]  %s250, 48, %s253, [#allocation8]
        $region20: #{tpu_custom_call.1} parent=11 // pred_fallthru
          _
        // Predicated region
        $region21: #{tpu_custom_call.1} parent=11 // pred_check
          %p256 = pneg %p139
        $region22: #{tpu_custom_call.1} parent=11 // pred_check_branch
          %258 = sbr.rel (%p256) target = $region24
        $region23: #{tpu_custom_call.1} parent=11 // pred_region
          %s260 = ssub.s32 128, 128
          %261 = vsyncadd [#allocation11], %s260
          %s263 = sshll.u32 [#allocation10], 4
          %s264 = int_to_ptr.vmem [resolvable:$true] %s263
          %266 = dma.hbm_to_vmem [thread:$0]  %s3, 128, %s264, [#allocation11]
        $region24: #{tpu_custom_call.1} parent=11 // pred_fallthru
          _
        // Predicated region
        $region25: #{tpu_custom_call.1} parent=11 // pred_check
          %p267 = pneg %p160
        $region26: #{tpu_custom_call.1} parent=11 // pred_check_branch
          %269 = sbr.rel (%p267) target = $region28
        $region27: #{tpu_custom_call.1} parent=11 // pred_region
          %s271 = ssub.s32 128, 128
          %272 = vsyncadd [#allocation11], %s271
          %s274 = sshll.u32 [#allocation12], 4
          %s275 = int_to_ptr.vmem [resolvable:$true] %s274
          %277 = dma.hbm_to_vmem [thread:$0]  %s4, 128, %s275, [#allocation11]
        $region28: #{tpu_custom_call.1} parent=11 // pred_fallthru
          _
        // Predicated region
        $region29: #{tpu_custom_call.1} parent=11 // pred_check
          %p278 = pneg %p181
        $region30: #{tpu_custom_call.1} parent=11 // pred_check_branch
          %280 = sbr.rel (%p278) target = $region32
        $region31: #{tpu_custom_call.1} parent=11 // pred_region
          %s282 = ssub.s32 128, 128
          %283 = vsyncadd [#allocation14], %s282
          %s285 = sshll.u32 [#allocation13], 4
          %s286 = int_to_ptr.vmem [resolvable:$true] %s285
          %288 = dma.hbm_to_vmem [thread:$0]  %s5, 128, %s286, [#allocation14]
        $region32: #{tpu_custom_call.1} parent=11 // pred_fallthru
          _
      $region12: #{tpu_custom_call.1} parent=5 // pred_fallthru
        _
      %p289 = scmp.lt.s32.totalorder %s21, 2
      // Predicated region
      $region33: #{tpu_custom_call.1} parent=5 // pred_check
        %p290 = pneg %p289
      $region34: #{tpu_custom_call.1} parent=5 // pred_check_branch
        %292 = sbr.rel (%p290) target = $region36
      $region35: #{tpu_custom_call.1} parent=5 // pred_region
        // Predicated region
        $region37: #{tpu_custom_call.1} parent=35 // pred_check
          %p293 = pneg %p60
        $region38: #{tpu_custom_call.1} parent=35 // pred_check_branch
          %295 = sbr.rel (%p293) target = $region40
        $region39: #{tpu_custom_call.1} parent=35 // pred_region
          %s296 = sand.u32 %s50, 1
          %s297 = scalar_lea.sflag [#allocation5], %s296
          %s298 = sand.u32 %s50, 1
          %s299 = smul.addr %s298, 8
          %s300 = scalar_lea.vmem [#allocation4], %s299
          %s302 = ssub.s32 128, 128
          %303 = vsyncadd %s297, %s302
          %s304 = smul.addr %s28, 128
          %s305 = scalar_lea.hbm %s0, %s304
          %s307 = sshll.u32 %s300, 4
          %s308 = int_to_ptr.vmem [resolvable:$true] %s307
          %310 = dma.hbm_to_vmem [thread:$0]  %s305, 128, %s308, %s297
        $region40: #{tpu_custom_call.1} parent=35 // pred_fallthru
          _
      $region36: #{tpu_custom_call.1} parent=5 // pred_fallthru
        _
      %p311 = scmp.le.s32.totalorder 1, %s21
      %p312 = scmp.lt.s32.totalorder %s21, 3
      %p313 = pnand %p311, %p312
      %p314 = pneg %p313
      // Predicated region
      $region41: #{tpu_custom_call.1} parent=5 // pred_check
        _
      $region42: #{tpu_custom_call.1} parent=5 // pred_check_branch
        %316 = sbr.rel (%p313) target = $region44
      $region43: #{tpu_custom_call.1} parent=5 // pred_region
        %s317 = ssub.s32 %s21, 1
        %s318 = sand.u32 %s53, 1
        %s319 = scalar_lea.sflag [#allocation5], %s318
        %s320 = sand.u32 %s53, 1
        %s321 = smul.addr %s320, 8
        %s322 = scalar_lea.vmem [#allocation4], %s321
        // Predicated region
        $region45: #{tpu_custom_call.1} parent=43 // pred_check
          %p323 = pneg %p66
        $region46: #{tpu_custom_call.1} parent=43 // pred_check_branch
          %325 = sbr.rel (%p323) target = $region48
        $region47: #{tpu_custom_call.1} parent=43 // pred_region
          %326 = dma.done %s319, 128
        $region48: #{tpu_custom_call.1} parent=43 // pred_fallthru
          _
        // Predicated region
        $region49: #{tpu_custom_call.1} parent=43 // pred_check
          %p327 = pneg %p92
        $region50: #{tpu_custom_call.1} parent=43 // pred_check_branch
          %329 = sbr.rel (%p327) target = $region52
        $region51: #{tpu_custom_call.1} parent=43 // pred_region
          %330 = dma.done [#allocation8], 6144
        $region52: #{tpu_custom_call.1} parent=43 // pred_fallthru
          _
        // Predicated region
        $region53: #{tpu_custom_call.1} parent=43 // pred_check
          %p331 = pneg %p118
        $region54: #{tpu_custom_call.1} parent=43 // pred_check_branch
          %333 = sbr.rel (%p331) target = $region56
        $region55: #{tpu_custom_call.1} parent=43 // pred_region
          %334 = dma.done [#allocation8], 48
        $region56: #{tpu_custom_call.1} parent=43 // pred_fallthru
          _
        // Predicated region
        $region57: #{tpu_custom_call.1} parent=43 // pred_check
          %p335 = pneg %p139
        $region58: #{tpu_custom_call.1} parent=43 // pred_check_branch
          %337 = sbr.rel (%p335) target = $region60
        $region59: #{tpu_custom_call.1} parent=43 // pred_region
          %338 = dma.done [#allocation11], 128
        $region60: #{tpu_custom_call.1} parent=43 // pred_fallthru
          _
        // Predicated region
        $region61: #{tpu_custom_call.1} parent=43 // pred_check
          %p339 = pneg %p160
        $region62: #{tpu_custom_call.1} parent=43 // pred_check_branch
          %341 = sbr.rel (%p339) target = $region64
        $region63: #{tpu_custom_call.1} parent=43 // pred_region
          %342 = dma.done [#allocation11], 128
        $region64: #{tpu_custom_call.1} parent=43 // pred_fallthru
          _
        // Predicated region
        $region65: #{tpu_custom_call.1} parent=43 // pred_check
          %p343 = pneg %p181
        $region66: #{tpu_custom_call.1} parent=43 // pred_check_branch
          %345 = sbr.rel (%p343) target = $region68
        $region67: #{tpu_custom_call.1} parent=43 // pred_region
          %346 = dma.done [#allocation14], 128
        $region68: #{tpu_custom_call.1} parent=43 // pred_fallthru
          _
        %s347 = sand.u32 %s53, 1
        %s348 = scalar_lea.sflag [#allocation5], %s347
        %s349 = sand.u32 %s53, 1
        %s350 = smul.addr %s349, 8
        %s351 = scalar_lea.vmem [#allocation4], %s350
        %p352 = pneg %p66
        %p353 = pneg %p63
        %p354 = pneg %p92
        %p355 = pneg %p89
        %p356 = pneg %p118
        %p357 = pneg %p115
        %p358 = pneg %p139
        %p359 = pneg %p136
        %p360 = pneg %p160
        %p361 = pneg %p157
        %p362 = pneg %p181
        %p363 = pneg %p178
        %p364 = pneg %p211
        %p365 = pneg %p208
        %s366 = sand.u32 %s198, 1
        %s367 = scalar_lea.sflag [#allocation6], %s366
        %s368 = sand.u32 %s198, 1
        %s369 = smul.addr %s368, 8
        %s370 = scalar_lea.vmem [#allocation15], %s369
        %p371 = scmp.eq.s32.totalorder %s33, 0
        // Predicated region
        $region69: #{tpu_custom_call.1} parent=43 // pred_check
          %p372 = pneg %p371
        $region70: #{tpu_custom_call.1} parent=43 // pred_check_branch
          %374 = sbr.rel (%p372) target = $region72
        $region71: #{tpu_custom_call.1} parent=43 // pred_region
          %v375 = vld [vmem:[%s322] sm:$0xff]
          %v376 = vld [vmem:[#allocation7 + $0x8] sm:$0xff]
          %v377 = vld [vmem:[#allocation7 + $0x10] sm:$0xff]
          %v378 = vld [vmem:[#allocation7 + $0x20] sm:$0xff]
          %v379 = vld [vmem:[#allocation7 + $0x28] sm:$0xff]
          %v380 = vld [vmem:[#allocation7 + $0x38] sm:$0xff]
          %v381 = vld [vmem:[#allocation7 + $0x40] sm:$0xff]
          %v382 = vld [vmem:[#allocation7 + $0x50] sm:$0xff]
          %v383 = vld [vmem:[#allocation7 + $0x58] sm:$0xff]
          %v384 = vld [vmem:[#allocation7 + $0x68] sm:$0xff]
          %v385 = vld [vmem:[#allocation7 + $0x70] sm:$0xff]
          %v386 = vld [vmem:[#allocation7 + $0x80] sm:$0xff]
          %v387 = vld [vmem:[#allocation7 + $0x88] sm:$0xff]
          %v388 = vld [vmem:[#allocation7 + $0x98] sm:$0xff]
          %v389 = vld [vmem:[#allocation7 + $0xa0] sm:$0xff]
          %v390 = vld [vmem:[#allocation7 + $0xb0] sm:$0xff]
          %v391 = vld [vmem:[#allocation7 + $0xb8] sm:$0xff]
          %v392 = vld [vmem:[#allocation7 + $0xc8] sm:$0xff]
          %v393 = vld [vmem:[#allocation7 + $0xd0] sm:$0xff]
          %v394 = vld [vmem:[#allocation7 + $0xe0] sm:$0xff]
          %v395 = vld [vmem:[#allocation7 + $0xe8] sm:$0xff]
          %v396 = vld [vmem:[#allocation7 + $0xf8] sm:$0xff]
          %v397 = vld [vmem:[#allocation7 + $0x100] sm:$0xff]
          %v398 = vld [vmem:[#allocation7 + $0x110] sm:$0xff]
          %v399 = vld [vmem:[#allocation7 + $0x118] sm:$0xff]
          %v400 = vld [vmem:[#allocation7 + $0x128] sm:$0xff]
          %v401 = vld [vmem:[#allocation7 + $0x130] sm:$0xff]
          %v402 = vld [vmem:[#allocation7 + $0x140] sm:$0xff]
          %v403 = vld [vmem:[#allocation7 + $0x148] sm:$0xff]
          %v404 = vld [vmem:[#allocation7 + $0x158] sm:$0xff]
          %v405 = vld [vmem:[#allocation7 + $0x160] sm:$0xff]
          %v406 = vld [vmem:[#allocation7 + $0x170] sm:$0xff]
          %v407 = vld [vmem:[#allocation7 + $0x178] sm:$0xff]
          %v408 = vld [vmem:[#allocation9 + $0x1] sm:$0x3]
          %v410 = vlaneseq
          %v411 = vshrl.u32 %v410, 7
          %v412 = vsub.s32 0, %v411
          %v413 = vrot.slane %v408, %v412
          %v414 = vlaneseq
          %v415 = vshrl.u32 %v414, 7
          %v416 = vsub.s32 1, %v415
          %v417 = vrot.slane %v408, %v416
          %420 = vmatprep.subr.mxu0 %v377
          %421 = vmatpush1.msra.mxu0 %v376
          %422 = vmatprep.subr.mxu0 %v379
          %423 = vmatpush1.msra.mxu0 %v378
          %424 = vmatprep.subr.mxu0 %v381
          %425 = vmatpush1.msra.mxu0 %v380
          %426 = vmatprep.subr.mxu0 %v383
          %427 = vmatpush1.msra.mxu0 %v382
          %428 = vmatprep.subr.mxu0 %v385
          %429 = vmatpush1.msra.mxu0 %v384
          %430 = vmatprep.subr.mxu0 %v387
          %431 = vmatpush1.msra.mxu0 %v386
          %432 = vmatprep.subr.mxu0 %v389
          %433 = vmatpush1.msra.mxu0 %v388
          %434 = vmatprep.subr.mxu0 %v391
          %435 = vmatpush1.msra.mxu0 %v390
          %436 = vmatprep.subr.mxu0 %v393
          %437 = vmatpush1.msra.mxu0 %v392
          %438 = vmatprep.subr.mxu0 %v395
          %439 = vmatpush1.msra.mxu0 %v394
          %440 = vmatprep.subr.mxu0 %v397
          %441 = vmatpush1.msra.mxu0 %v396
          %442 = vmatprep.subr.mxu0 %v399
          %443 = vmatpush1.msra.mxu0 %v398
          %444 = vmatprep.subr.mxu0 %v401
          %445 = vmatpush1.msra.mxu0 %v400
          %446 = vmatprep.subr.mxu0 %v403
          %447 = vmatpush1.msra.mxu0 %v402
          %448 = vmatprep.subr.mxu0 %v405
          %449 = vmatpush1.msra.mxu0 %v404
          %450 = vmatprep.subr.mxu0 %v407
          %451 = vmatpush1.msra.mxu0 %v406
          %452 = vmatprep.subr.mxu0 0.0
          %453 = vmatpush1.msra.mxu0 0.0
          %454 = vmatprep.subr.mxu0 0.0
          %455 = vmatpush1.msra.mxu0 0.0
          %456 = vmatprep.subr.mxu0 0.0
          %457 = vmatpush1.msra.mxu0 0.0
          %458 = vmatprep.subr.mxu0 0.0
          %459 = vmatpush1.msra.mxu0 0.0
          %460 = vmatprep.subr.mxu0 0.0
          %461 = vmatpush1.msra.mxu0 0.0
          %462 = vmatprep.subr.mxu0 0.0
          %463 = vmatpush1.msra.mxu0 0.0
          %464 = vmatprep.subr.mxu0 0.0
          %465 = vmatpush1.msra.mxu0 0.0
          %466 = vmatprep.subr.mxu0 0.0
          %467 = vmatpush1.msra.mxu0 0.0
          %468 = vmatprep.subr.mxu0 0.0
          %469 = vmatpush1.msra.mxu0 0.0
          %470 = vmatprep.subr.mxu0 0.0
          %471 = vmatpush1.msra.mxu0 0.0
          %472 = vmatprep.subr.mxu0 0.0
          %473 = vmatpush1.msra.mxu0 0.0
          %474 = vmatprep.subr.mxu0 0.0
          %475 = vmatpush1.msra.mxu0 0.0
          %476 = vmatprep.subr.mxu0 0.0
          %477 = vmatpush1.msra.mxu0 0.0
          %478 = vmatprep.subr.mxu0 0.0
          %479 = vmatpush1.msra.mxu0 0.0
          %480 = vmatprep.subr.mxu0 0.0
          %481 = vmatpush1.msra.mxu0 0.0
          %482 = vmatprep.subr.mxu0 0.0
          %483 = vmatpush1.msra.mxu0 0.0
          %484 = vmatprep.mubr.f32.mxu0 0.0
          %485 = vmatmul.mubr.f32.gmra.mrb[0].mxu0 %v375
          %v486 = vpop.f32.mrb[0].mxu0
          %v487 = vadd.f32 %v413, %v486
          %v488 = vpop.f32.mrb[0].mxu0
          %v489 = vadd.f32 %v417, %v488
          %490 = vdwg.mxu0
          %v491 = vld [vmem:[#allocation10] sm:$0xff]
          %493 = vrot.lane.b32.xlu0 %v491, 64
          %v494 = vpop.permute.xlu0 %493
          %vm496 = vcmask 523264
          %v497 = vsel %vm496, %v491, %v494
          %v498 = vld [vmem:[#allocation12] sm:$0xff]
          %500 = vrot.lane.b32.xlu0 %v498, 64
          %v501 = vpop.permute.xlu0 %500
          %v503 = vsel %vm496, %v498, %v501
          %v504 = vld [vmem:[#allocation13] sm:$0xff]
          %506 = vrot.lane.b32.xlu0 %v504, 64
          %v507 = vpop.permute.xlu0 %506
          %v509 = vsel %vm496, %v504, %v507
          %v510 = vmul.f32 %v487, %v497
          %511 = vrot.lane.b32.xlu0 %v487, 32
          %v512 = vpop.permute.xlu0 %511
          %v513 = vmul.f32 %v512, %v503
          %v514 = vadd.f32 %v510, %v513
          %515 = vrot.lane.b32.xlu0 %v487, 96
          %v516 = vpop.permute.xlu0 %515
          %v517 = vmul.f32 %v516, %v509
          %v518 = vadd.f32 %v514, %v517
          %519 = vst [vmem:[#allocation2] sm:$0xff] %v518
          %520 = vst [vmem:[#allocation3] sm:$0xff] %v489
        $region72: #{tpu_custom_call.1} parent=43 // pred_fallthru
          _
        %s521 = smul.u32 %s33, 8
        %s522 = scalar_lea.vmem %s322, %s521 [#allocation4]
        %v523 = vld [vmem:[%s522] sm:$0xff]
        %v524 = vld [vmem:[#allocation7] sm:$0xff]
        %v525 = vld [vmem:[#allocation7 + $0x18] sm:$0xff]
        %v526 = vld [vmem:[#allocation7 + $0x30] sm:$0xff]
        %v527 = vld [vmem:[#allocation7 + $0x48] sm:$0xff]
        %v528 = vld [vmem:[#allocation7 + $0x60] sm:$0xff]
        %v529 = vld [vmem:[#allocation7 + $0x78] sm:$0xff]
        %v530 = vld [vmem:[#allocation7 + $0x90] sm:$0xff]
        %v531 = vld [vmem:[#allocation7 + $0xa8] sm:$0xff]
        %v532 = vld [vmem:[#allocation7 + $0xc0] sm:$0xff]
        %v533 = vld [vmem:[#allocation7 + $0xd8] sm:$0xff]
        %v534 = vld [vmem:[#allocation7 + $0xf0] sm:$0xff]
        %v535 = vld [vmem:[#allocation7 + $0x108] sm:$0xff]
        %v536 = vld [vmem:[#allocation7 + $0x120] sm:$0xff]
        %v537 = vld [vmem:[#allocation7 + $0x138] sm:$0xff]
        %v538 = vld [vmem:[#allocation7 + $0x150] sm:$0xff]
        %v539 = vld [vmem:[#allocation7 + $0x168] sm:$0xff]
        %v540 = vld [vmem:[#allocation9] sm:$0x1]
        %v542 = vlaneseq
        %v543 = vshrl.u32 %v542, 7
        %v544 = vsub.s32 0, %v543
        %v545 = vrot.slane %v540, %v544
        %547 = vmatprep.subr.mxu0 0.0
        %548 = vmatpush1.msra.mxu0 %v524
        %549 = vmatprep.subr.mxu0 0.0
        %550 = vmatpush1.msra.mxu0 %v525
        %551 = vmatprep.subr.mxu0 0.0
        %552 = vmatpush1.msra.mxu0 %v526
        %553 = vmatprep.subr.mxu0 0.0
        %554 = vmatpush1.msra.mxu0 %v527
        %555 = vmatprep.subr.mxu0 0.0
        %556 = vmatpush1.msra.mxu0 %v528
        %557 = vmatprep.subr.mxu0 0.0
        %558 = vmatpush1.msra.mxu0 %v529
        %559 = vmatprep.subr.mxu0 0.0
        %560 = vmatpush1.msra.mxu0 %v530
        %561 = vmatprep.subr.mxu0 0.0
        %562 = vmatpush1.msra.mxu0 %v531
        %563 = vmatprep.subr.mxu0 0.0
        %564 = vmatpush1.msra.mxu0 %v532
        %565 = vmatprep.subr.mxu0 0.0
        %566 = vmatpush1.msra.mxu0 %v533
        %567 = vmatprep.subr.mxu0 0.0
        %568 = vmatpush1.msra.mxu0 %v534
        %569 = vmatprep.subr.mxu0 0.0
        %570 = vmatpush1.msra.mxu0 %v535
        %571 = vmatprep.subr.mxu0 0.0
        %572 = vmatpush1.msra.mxu0 %v536
        %573 = vmatprep.subr.mxu0 0.0
        %574 = vmatpush1.msra.mxu0 %v537
        %575 = vmatprep.subr.mxu0 0.0
        %576 = vmatpush1.msra.mxu0 %v538
        %577 = vmatprep.subr.mxu0 0.0
        %578 = vmatpush1.msra.mxu0 %v539
        %579 = vmatprep.subr.mxu0 0.0
        %580 = vmatpush1.msra.mxu0 0.0
        %581 = vmatprep.subr.mxu0 0.0
        %582 = vmatpush1.msra.mxu0 0.0
        %583 = vmatprep.subr.mxu0 0.0
        %584 = vmatpush1.msra.mxu0 0.0
        %585 = vmatprep.subr.mxu0 0.0
        %586 = vmatpush1.msra.mxu0 0.0
        %587 = vmatprep.subr.mxu0 0.0
        %588 = vmatpush1.msra.mxu0 0.0
        %589 = vmatprep.subr.mxu0 0.0
        %590 = vmatpush1.msra.mxu0 0.0
        %591 = vmatprep.subr.mxu0 0.0
        %592 = vmatpush1.msra.mxu0 0.0
        %593 = vmatprep.subr.mxu0 0.0
        %594 = vmatpush1.msra.mxu0 0.0
        %595 = vmatprep.subr.mxu0 0.0
        %596 = vmatpush1.msra.mxu0 0.0
        %597 = vmatprep.subr.mxu0 0.0
        %598 = vmatpush1.msra.mxu0 0.0
        %599 = vmatprep.subr.mxu0 0.0
        %600 = vmatpush1.msra.mxu0 0.0
        %601 = vmatprep.subr.mxu0 0.0
        %602 = vmatpush1.msra.mxu0 0.0
        %603 = vmatprep.subr.mxu0 0.0
        %604 = vmatpush1.msra.mxu0 0.0
        %605 = vmatprep.subr.mxu0 0.0
        %606 = vmatpush1.msra.mxu0 0.0
        %607 = vmatprep.subr.mxu0 0.0
        %608 = vmatpush1.msra.mxu0 0.0
        %609 = vmatprep.subr.mxu0 0.0
        %610 = vmatpush1.msra.mxu0 0.0
        %611 = vmatprep.mubr.f32.mxu0 0.0
        %612 = vmatmul.mubr.f32.gmra.mrb[0].mxu0 %v523
        %v613 = vpop.f32.mrb[0].mxu0
        %v614 = vadd.f32 %v545, %v613
        %v615 = vpop.f32.mrb[0].mxu0
        %616 = vdwg.mxu0
        %s617 = scalar_lea.vmem [#allocation10], %s521
        %v618 = vld [vmem:[%s617] sm:$0xff]
        %620 = vrot.lane.b32.xlu0 %v618, 64
        %v621 = vpop.permute.xlu0 %620
        %vm623 = vcmask 523264
        %v624 = vsel %vm623, %v618, %v621
        %s625 = scalar_lea.vmem [#allocation12], %s521
        %v626 = vld [vmem:[%s625] sm:$0xff]
        %628 = vrot.lane.b32.xlu0 %v626, 64
        %v629 = vpop.permute.xlu0 %628
        %v631 = vsel %vm623, %v626, %v629
        %s632 = scalar_lea.vmem [#allocation13], %s521
        %v633 = vld [vmem:[%s632] sm:$0xff]
        %635 = vrot.lane.b32.xlu0 %v633, 64
        %v636 = vpop.permute.xlu0 %635
        %v638 = vsel %vm623, %v633, %v636
        %v639 = vmul.f32 %v614, %v624
        %640 = vrot.lane.b32.xlu0 %v614, 32
        %v641 = vpop.permute.xlu0 %640
        %v642 = vmul.f32 %v641, %v631
        %v643 = vadd.f32 %v639, %v642
        %644 = vrot.lane.b32.xlu0 %v614, 96
        %v645 = vpop.permute.xlu0 %644
        %v646 = vmul.f32 %v645, %v638
        %v647 = vadd.f32 %v643, %v646
        %v648 = vld [vmem:[#allocation2] sm:$0xff]
        %v649 = vld [vmem:[#allocation3] sm:$0xff]
        %v651 = vsel %vm623, %v647, 0
        %v654 = vsel %vm623, %v648, 0
        %656 = vmatprep.subr.mxu0 0.0
        %657 = vmatpush1.xpose.msra.mxu0 %v654
        %658 = vmatprep.subr.mxu0 0.0
        %659 = vmatpush1.xpose.msra.mxu0 0.0
        %660 = vmatprep.subr.mxu0 0.0
        %661 = vmatpush1.xpose.msra.mxu0 0.0
        %662 = vmatprep.subr.mxu0 0.0
        %663 = vmatpush1.xpose.msra.mxu0 0.0
        %664 = vmatprep.subr.mxu0 0.0
        %665 = vmatpush1.xpose.msra.mxu0 0.0
        %666 = vmatprep.subr.mxu0 0.0
        %667 = vmatpush1.xpose.msra.mxu0 0.0
        %668 = vmatprep.subr.mxu0 0.0
        %669 = vmatpush1.xpose.msra.mxu0 0.0
        %670 = vmatprep.subr.mxu0 0.0
        %671 = vmatpush1.xpose.msra.mxu0 0.0
        %672 = vmatprep.subr.mxu0 0.0
        %673 = vmatpush1.xpose.msra.mxu0 0.0
        %674 = vmatprep.subr.mxu0 0.0
        %675 = vmatpush1.xpose.msra.mxu0 0.0
        %676 = vmatprep.subr.mxu0 0.0
        %677 = vmatpush1.xpose.msra.mxu0 0.0
        %678 = vmatprep.subr.mxu0 0.0
        %679 = vmatpush1.xpose.msra.mxu0 0.0
        %680 = vmatprep.subr.mxu0 0.0
        %681 = vmatpush1.xpose.msra.mxu0 0.0
        %682 = vmatprep.subr.mxu0 0.0
        %683 = vmatpush1.xpose.msra.mxu0 0.0
        %684 = vmatprep.subr.mxu0 0.0
        %685 = vmatpush1.xpose.msra.mxu0 0.0
        %686 = vmatprep.subr.mxu0 0.0
        %687 = vmatpush1.xpose.msra.mxu0 0.0
        %688 = vmatprep.subr.mxu0 0.0
        %689 = vmatpush1.xpose.msra.mxu0 0.0
        %690 = vmatprep.subr.mxu0 0.0
        %691 = vmatpush1.xpose.msra.mxu0 0.0
        %692 = vmatprep.subr.mxu0 0.0
        %693 = vmatpush1.xpose.msra.mxu0 0.0
        %694 = vmatprep.subr.mxu0 0.0
        %695 = vmatpush1.xpose.msra.mxu0 0.0
        %696 = vmatprep.subr.mxu0 0.0
        %697 = vmatpush1.xpose.msra.mxu0 0.0
        %698 = vmatprep.subr.mxu0 0.0
        %699 = vmatpush1.xpose.msra.mxu0 0.0
        %700 = vmatprep.subr.mxu0 0.0
        %701 = vmatpush1.xpose.msra.mxu0 0.0
        %702 = vmatprep.subr.mxu0 0.0
        %703 = vmatpush1.xpose.msra.mxu0 0.0
        %704 = vmatprep.subr.mxu0 0.0
        %705 = vmatpush1.xpose.msra.mxu0 0.0
        %706 = vmatprep.subr.mxu0 0.0
        %707 = vmatpush1.xpose.msra.mxu0 0.0
        %708 = vmatprep.subr.mxu0 0.0
        %709 = vmatpush1.xpose.msra.mxu0 0.0
        %710 = vmatprep.subr.mxu0 0.0
        %711 = vmatpush1.xpose.msra.mxu0 0.0
        %712 = vmatprep.subr.mxu0 0.0
        %713 = vmatpush1.xpose.msra.mxu0 0.0
        %714 = vmatprep.subr.mxu0 0.0
        %715 = vmatpush1.xpose.msra.mxu0 0.0
        %716 = vmatprep.subr.mxu0 0.0
        %717 = vmatpush1.xpose.msra.mxu0 0.0
        %718 = vmatprep.subr.mxu0 0.0
        %719 = vmatpush1.xpose.msra.mxu0 0.0
        %720 = vmatprep.mubr.f32.mxu0 0.0
        %721 = vmatmul.mubr.f32.gmra.mrb[0].mxu0 %v651
        %v722 = vpop.f32.mrb[0].mxu0
        %v723 = vadd.f32 0.0, %v722
        %v724 = vpop.f32.mrb[0].mxu0
        %725 = vdwg.mxu0
        %vm726 = vcmask 64512
        %v727 = vsel %vm726, %v723, -inf
        %728 = vmax.xlane.f32.xlu0 %v727
        %v729 = vpop.xlane.xlu0 %728
        %v730 = vsub.f32 %v723, %v729
        %v731 = vmul.f32 %v730, 1.442695
        %v732 = vpow.pop %v731
        %v733 = vsel %vm726, %v732, 0.0
        %734 = vadd.xlane.f32.xlu0 %v733
        %v735 = vpop.xlane.xlu0 %734
        %v736 = vrcp.pop %v735
        %v737 = vmul.f32 %v732, %v736
        %v739 = vsel %vm726, %v737, 0
        %741 = vmatprep.subr.mxu0 0.0
        %742 = vmatpush1.msra.mxu0 %v649
        %743 = vmatprep.subr.mxu0 0.0
        %744 = vmatpush1.msra.mxu0 0.0
        %745 = vmatprep.subr.mxu0 0.0
        %746 = vmatpush1.msra.mxu0 0.0
        %747 = vmatprep.subr.mxu0 0.0
        %748 = vmatpush1.msra.mxu0 0.0
        %749 = vmatprep.subr.mxu0 0.0
        %750 = vmatpush1.msra.mxu0 0.0
        %751 = vmatprep.subr.mxu0 0.0
        %752 = vmatpush1.msra.mxu0 0.0
        %753 = vmatprep.subr.mxu0 0.0
        %754 = vmatpush1.msra.mxu0 0.0
        %755 = vmatprep.subr.mxu0 0.0
        %756 = vmatpush1.msra.mxu0 0.0
        %757 = vmatprep.subr.mxu0 0.0
        %758 = vmatpush1.msra.mxu0 0.0
        %759 = vmatprep.subr.mxu0 0.0
        %760 = vmatpush1.msra.mxu0 0.0
        %761 = vmatprep.subr.mxu0 0.0
        %762 = vmatpush1.msra.mxu0 0.0
        %763 = vmatprep.subr.mxu0 0.0
        %764 = vmatpush1.msra.mxu0 0.0
        %765 = vmatprep.subr.mxu0 0.0
        %766 = vmatpush1.msra.mxu0 0.0
        %767 = vmatprep.subr.mxu0 0.0
        %768 = vmatpush1.msra.mxu0 0.0
        %769 = vmatprep.subr.mxu0 0.0
        %770 = vmatpush1.msra.mxu0 0.0
        %771 = vmatprep.subr.mxu0 0.0
        %772 = vmatpush1.msra.mxu0 0.0
        %773 = vmatprep.subr.mxu0 0.0
        %774 = vmatpush1.msra.mxu0 0.0
        %775 = vmatprep.subr.mxu0 0.0
        %776 = vmatpush1.msra.mxu0 0.0
        %777 = vmatprep.subr.mxu0 0.0
        %778 = vmatpush1.msra.mxu0 0.0
        %779 = vmatprep.subr.mxu0 0.0
        %780 = vmatpush1.msra.mxu0 0.0
        %781 = vmatprep.subr.mxu0 0.0
        %782 = vmatpush1.msra.mxu0 0.0
        %783 = vmatprep.subr.mxu0 0.0
        %784 = vmatpush1.msra.mxu0 0.0
        %785 = vmatprep.subr.mxu0 0.0
        %786 = vmatpush1.msra.mxu0 0.0
        %787 = vmatprep.subr.mxu0 0.0
        %788 = vmatpush1.msra.mxu0 0.0
        %789 = vmatprep.subr.mxu0 0.0
        %790 = vmatpush1.msra.mxu0 0.0
        %791 = vmatprep.subr.mxu0 0.0
        %792 = vmatpush1.msra.mxu0 0.0
        %793 = vmatprep.subr.mxu0 0.0
        %794 = vmatpush1.msra.mxu0 0.0
        %795 = vmatprep.subr.mxu0 0.0
        %796 = vmatpush1.msra.mxu0 0.0
        %797 = vmatprep.subr.mxu0 0.0
        %798 = vmatpush1.msra.mxu0 0.0
        %799 = vmatprep.subr.mxu0 0.0
        %800 = vmatpush1.msra.mxu0 0.0
        %801 = vmatprep.subr.mxu0 0.0
        %802 = vmatpush1.msra.mxu0 0.0
        %803 = vmatprep.subr.mxu0 0.0
        %804 = vmatpush1.msra.mxu0 0.0
        %805 = vmatprep.mubr.f32.mxu0 0.0
        %806 = vmatmul.mubr.f32.gmra.mrb[0].mxu0 %v739
        %v807 = vpop.f32.mrb[0].mxu0
        %v808 = vadd.f32 0.0, %v807
        %v809 = vpop.f32.mrb[0].mxu0
        %810 = vdwg.mxu0
        %811 = vst.msk [vmem:[%s370] sm:$0xff] %vm623, %v808
        %v812 = vld [vmem:[#allocation2] sm:$0xff]
        %v813 = vld [vmem:[#allocation3] sm:$0xff]
        %814 = vrot.lane.b32.xlu0 %v647, 64
        %v815 = vpop.permute.xlu0 %814
        %817 = vrot.lane.b32.xlu0 %v812, 64
        %v818 = vpop.permute.xlu0 %817
        %v819 = vsel %vm623, %v815, 0
        %v821 = vsel %vm623, %v818, 0
        %823 = vmatprep.subr.mxu0 0.0
        %824 = vmatpush1.xpose.msra.mxu0 %v821
        %825 = vmatprep.subr.mxu0 0.0
        %826 = vmatpush1.xpose.msra.mxu0 0.0
        %827 = vmatprep.subr.mxu0 0.0
        %828 = vmatpush1.xpose.msra.mxu0 0.0
        %829 = vmatprep.subr.mxu0 0.0
        %830 = vmatpush1.xpose.msra.mxu0 0.0
        %831 = vmatprep.subr.mxu0 0.0
        %832 = vmatpush1.xpose.msra.mxu0 0.0
        %833 = vmatprep.subr.mxu0 0.0
        %834 = vmatpush1.xpose.msra.mxu0 0.0
        %835 = vmatprep.subr.mxu0 0.0
        %836 = vmatpush1.xpose.msra.mxu0 0.0
        %837 = vmatprep.subr.mxu0 0.0
        %838 = vmatpush1.xpose.msra.mxu0 0.0
        %839 = vmatprep.subr.mxu0 0.0
        %840 = vmatpush1.xpose.msra.mxu0 0.0
        %841 = vmatprep.subr.mxu0 0.0
        %842 = vmatpush1.xpose.msra.mxu0 0.0
        %843 = vmatprep.subr.mxu0 0.0
        %844 = vmatpush1.xpose.msra.mxu0 0.0
        %845 = vmatprep.subr.mxu0 0.0
        %846 = vmatpush1.xpose.msra.mxu0 0.0
        %847 = vmatprep.subr.mxu0 0.0
        %848 = vmatpush1.xpose.msra.mxu0 0.0
        %849 = vmatprep.subr.mxu0 0.0
        %850 = vmatpush1.xpose.msra.mxu0 0.0
        %851 = vmatprep.subr.mxu0 0.0
        %852 = vmatpush1.xpose.msra.mxu0 0.0
        %853 = vmatprep.subr.mxu0 0.0
        %854 = vmatpush1.xpose.msra.mxu0 0.0
        %855 = vmatprep.subr.mxu0 0.0
        %856 = vmatpush1.xpose.msra.mxu0 0.0
        %857 = vmatprep.subr.mxu0 0.0
        %858 = vmatpush1.xpose.msra.mxu0 0.0
        %859 = vmatprep.subr.mxu0 0.0
        %860 = vmatpush1.xpose.msra.mxu0 0.0
        %861 = vmatprep.subr.mxu0 0.0
        %862 = vmatpush1.xpose.msra.mxu0 0.0
        %863 = vmatprep.subr.mxu0 0.0
        %864 = vmatpush1.xpose.msra.mxu0 0.0
        %865 = vmatprep.subr.mxu0 0.0
        %866 = vmatpush1.xpose.msra.mxu0 0.0
        %867 = vmatprep.subr.mxu0 0.0
        %868 = vmatpush1.xpose.msra.mxu0 0.0
        %869 = vmatprep.subr.mxu0 0.0
        %870 = vmatpush1.xpose.msra.mxu0 0.0
        %871 = vmatprep.subr.mxu0 0.0
        %872 = vmatpush1.xpose.msra.mxu0 0.0
        %873 = vmatprep.subr.mxu0 0.0
        %874 = vmatpush1.xpose.msra.mxu0 0.0
        %875 = vmatprep.subr.mxu0 0.0
        %876 = vmatpush1.xpose.msra.mxu0 0.0
        %877 = vmatprep.subr.mxu0 0.0
        %878 = vmatpush1.xpose.msra.mxu0 0.0
        %879 = vmatprep.subr.mxu0 0.0
        %880 = vmatpush1.xpose.msra.mxu0 0.0
        %881 = vmatprep.subr.mxu0 0.0
        %882 = vmatpush1.xpose.msra.mxu0 0.0
        %883 = vmatprep.subr.mxu0 0.0
        %884 = vmatpush1.xpose.msra.mxu0 0.0
        %885 = vmatprep.subr.mxu0 0.0
        %886 = vmatpush1.xpose.msra.mxu0 0.0
        %887 = vmatprep.mubr.f32.mxu0 0.0
        %888 = vmatmul.mubr.f32.gmra.mrb[0].mxu0 %v819
        %v889 = vpop.f32.mrb[0].mxu0
        %v890 = vadd.f32 0.0, %v889
        %v891 = vpop.f32.mrb[0].mxu0
        %892 = vdwg.mxu0
        %v893 = vsel %vm726, %v890, -inf
        %894 = vmax.xlane.f32.xlu0 %v893
        %v895 = vpop.xlane.xlu0 %894
        %v896 = vsub.f32 %v890, %v895
        %v897 = vmul.f32 %v896, 1.442695
        %v898 = vpow.pop %v897
        %v899 = vsel %vm726, %v898, 0.0
        %900 = vadd.xlane.f32.xlu0 %v899
        %v901 = vpop.xlane.xlu0 %900
        %v902 = vrcp.pop %v901
        %v903 = vmul.f32 %v898, %v902
        %905 = vrot.lane.b32.xlu0 %v813, 64
        %v906 = vpop.permute.xlu0 %905
        %v909 = vsel %vm726, %v903, 0
        %911 = vmatprep.subr.mxu0 0.0
        %912 = vmatpush1.msra.mxu0 %v906
        %913 = vmatprep.subr.mxu0 0.0
        %914 = vmatpush1.msra.mxu0 0.0
        %915 = vmatprep.subr.mxu0 0.0
        %916 = vmatpush1.msra.mxu0 0.0
        %917 = vmatprep.subr.mxu0 0.0
        %918 = vmatpush1.msra.mxu0 0.0
        %919 = vmatprep.subr.mxu0 0.0
        %920 = vmatpush1.msra.mxu0 0.0
        %921 = vmatprep.subr.mxu0 0.0
        %922 = vmatpush1.msra.mxu0 0.0
        %923 = vmatprep.subr.mxu0 0.0
        %924 = vmatpush1.msra.mxu0 0.0
        %925 = vmatprep.subr.mxu0 0.0
        %926 = vmatpush1.msra.mxu0 0.0
        %927 = vmatprep.subr.mxu0 0.0
        %928 = vmatpush1.msra.mxu0 0.0
        %929 = vmatprep.subr.mxu0 0.0
        %930 = vmatpush1.msra.mxu0 0.0
        %931 = vmatprep.subr.mxu0 0.0
        %932 = vmatpush1.msra.mxu0 0.0
        %933 = vmatprep.subr.mxu0 0.0
        %934 = vmatpush1.msra.mxu0 0.0
        %935 = vmatprep.subr.mxu0 0.0
        %936 = vmatpush1.msra.mxu0 0.0
        %937 = vmatprep.subr.mxu0 0.0
        %938 = vmatpush1.msra.mxu0 0.0
        %939 = vmatprep.subr.mxu0 0.0
        %940 = vmatpush1.msra.mxu0 0.0
        %941 = vmatprep.subr.mxu0 0.0
        %942 = vmatpush1.msra.mxu0 0.0
        %943 = vmatprep.subr.mxu0 0.0
        %944 = vmatpush1.msra.mxu0 0.0
        %945 = vmatprep.subr.mxu0 0.0
        %946 = vmatpush1.msra.mxu0 0.0
        %947 = vmatprep.subr.mxu0 0.0
        %948 = vmatpush1.msra.mxu0 0.0
        %949 = vmatprep.subr.mxu0 0.0
        %950 = vmatpush1.msra.mxu0 0.0
        %951 = vmatprep.subr.mxu0 0.0
        %952 = vmatpush1.msra.mxu0 0.0
        %953 = vmatprep.subr.mxu0 0.0
        %954 = vmatpush1.msra.mxu0 0.0
        %955 = vmatprep.subr.mxu0 0.0
        %956 = vmatpush1.msra.mxu0 0.0
        %957 = vmatprep.subr.mxu0 0.0
        %958 = vmatpush1.msra.mxu0 0.0
        %959 = vmatprep.subr.mxu0 0.0
        %960 = vmatpush1.msra.mxu0 0.0
        %961 = vmatprep.subr.mxu0 0.0
        %962 = vmatpush1.msra.mxu0 0.0
        %963 = vmatprep.subr.mxu0 0.0
        %964 = vmatpush1.msra.mxu0 0.0
        %965 = vmatprep.subr.mxu0 0.0
        %966 = vmatpush1.msra.mxu0 0.0
        %967 = vmatprep.subr.mxu0 0.0
        %968 = vmatpush1.msra.mxu0 0.0
        %969 = vmatprep.subr.mxu0 0.0
        %970 = vmatpush1.msra.mxu0 0.0
        %971 = vmatprep.subr.mxu0 0.0
        %972 = vmatpush1.msra.mxu0 0.0
        %973 = vmatprep.subr.mxu0 0.0
        %974 = vmatpush1.msra.mxu0 0.0
        %975 = vmatprep.mubr.f32.mxu0 0.0
        %976 = vmatmul.mubr.f32.gmra.mrb[0].mxu0 %v909
        %v977 = vpop.f32.mrb[0].mxu0
        %v978 = vadd.f32 0.0, %v977
        %v979 = vpop.f32.mrb[0].mxu0
        %980 = vdwg.mxu0
        %982 = vrot.lane.b32.xlu0 %v978, 64
        %v983 = vpop.permute.xlu0 %982
        %vm985 = vcmask 1048064
        %986 = vst.msk [vmem:[%s370] sm:$0xff] %vm985, %v983
        %s987 = sand.u32 %s198, 1
        %s988 = scalar_lea.sflag [#allocation6], %s987
        %s989 = sand.u32 %s198, 1
        %s990 = smul.addr %s989, 8
        %s991 = scalar_lea.vmem [#allocation15], %s990
        // Predicated region
        $region73: #{tpu_custom_call.1} parent=43 // pred_check
          %p992 = pneg %p208
        $region74: #{tpu_custom_call.1} parent=43 // pred_check_branch
          %994 = sbr.rel (%p992) target = $region76
        $region75: #{tpu_custom_call.1} parent=43 // pred_region
          %s996 = ssub.s32 128, 128
          %997 = vsyncadd %s988, %s996
          %s998 = sadd.s32 %s32, %s33
          %s999 = sadd.s32 %s998, %s31
          %s1000 = smul.addr %s999, 128
          %s1001 = scalar_lea.hbm %s6, %s1000
          %s1003 = sshll.u32 %s991, 4
          %s1004 = int_to_ptr.vmem [resolvable:$true] %s1003
          %1006 = dma.vmem_to_hbm [thread:$0]  %s1004, 128, %s1001, %s988
        $region76: #{tpu_custom_call.1} parent=43 // pred_fallthru
          _
      $region44: #{tpu_custom_call.1} parent=5 // pred_fallthru
        _
      %p1007 = scmp.le.s32.totalorder 2, %s21
      // Predicated region
      $region77: #{tpu_custom_call.1} parent=5 // pred_check
        %p1008 = pneg %p1007
      $region78: #{tpu_custom_call.1} parent=5 // pred_check_branch
        %1010 = sbr.rel (%p1008) target = $region80
      $region79: #{tpu_custom_call.1} parent=5 // pred_region
        %s1011 = ssub.s32 %s21, 2
        // Predicated region
        $region81: #{tpu_custom_call.1} parent=79 // pred_check
          %p1012 = pneg %p214
        $region82: #{tpu_custom_call.1} parent=79 // pred_check_branch
          %1014 = sbr.rel (%p1012) target = $region84
        $region83: #{tpu_custom_call.1} parent=79 // pred_region
          %s1015 = sand.u32 %s199, 1
          %s1016 = scalar_lea.sflag [#allocation6], %s1015
          %s1017 = sand.u32 %s199, 1
          %s1018 = smul.addr %s1017, 8
          %s1019 = scalar_lea.vmem [#allocation15], %s1018
          %1020 = dma.done %s1016, 128
        $region84: #{tpu_custom_call.1} parent=79 // pred_fallthru
          _
      $region80: #{tpu_custom_call.1} parent=5 // pred_fallthru
        _
    $region6: #{tpu_custom_call.1} parent=1 // loop_footer
      %s25 = sadd.s32 1, %s21
    $region7: #{tpu_custom_call.1} parent=1 // loop_footer_branch
      %20 = sbr.rel target = $region3
    $region8: #{tpu_custom_call.1} parent=1 // loop_exit
      _
    %1021 = vsyncpa [#allocation5], 1
    %s1022 = scalar_lea.sflag [#allocation5], 1
    %1023 = vsyncpa %s1022, 1
    %1024 = vsyncpa [#allocation8], 1
    %1025 = vsyncpa [#allocation11], 1
    %1026 = vsyncpa [#allocation14], 1
    %1027 = vsyncpa [#allocation6], 1
    %s1028 = scalar_lea.sflag [#allocation6], 1
    %1029 = vsyncpa %s1028, 1

</llo_original>
